<compile_context>
chip_gen: v7x
topology: tpu7x:2x2x1
jax: 0.10.0
libtpu: 0.0.40
codegen_flags: <defaults>
</compile_context>

<pallas_src>
import jax
import jax.numpy as jnp
from jax.experimental import pallas as pl
from jax.experimental.pallas import tpu as pltpu


def cbow_kernel(idx_ref, emb_ref, w1_ref, b1_ref, w2_ref, b2_ref, o_ref, x_ref):
    # idx_ref : (B, C) int32 context-word indices, SMEM (scalar prefetch)
    # emb_ref : (V, D) embedding table, VMEM
    # w1_ref  : (H, D) linear1 weight, PyTorch (out, in) layout
    # b1_ref  : (1, H)
    # w2_ref  : (V, H) linear2 weight, PyTorch (out, in) layout
    # b2_ref  : (1, V)
    # o_ref   : (TB, V) log-probabilities for this batch tile
    # x_ref   : (TB, D) VMEM scratch for the summed context embeddings
    tb = o_ref.shape[0]
    c = idx_ref.shape[1]
    base = pl.program_id(0) * tb

    # Fused embedding gather + sum over the context window (per batch row).
    for b in range(tb):
        row = emb_ref[pl.ds(idx_ref[base + b, 0], 1), :]
        for j in range(1, c):
            row = row + emb_ref[pl.ds(idx_ref[base + b, j], 1), :]
        x_ref[pl.ds(b, 1), :] = row

    x = x_ref[...]  # (TB, D)

    # Contract on the weights' `in` axis (dim 1): feeds the (out, in) operand
    # to the MXU directly, no transpose materialization in HBM or VMEM.
    dn = (((1,), (1,)), ((), ()))

    # linear1 + ReLU (f32 MXU accumulation)
    h = jax.lax.dot_general(x, w1_ref[...], dn,
                            preferred_element_type=jnp.float32) + b1_ref[...]
    h = jnp.maximum(h, 0.0)

    # linear2
    logits = jax.lax.dot_general(h, w2_ref[...], dn,
                                 preferred_element_type=jnp.float32) + b2_ref[...]

    # Numerically stable log_softmax over the vocab axis.
    m = jnp.max(logits, axis=-1, keepdims=True)
    shifted = logits - m
    lse = jnp.log(jnp.sum(jnp.exp(shifted), axis=-1, keepdims=True))
    o_ref[...] = (shifted - lse).astype(o_ref.dtype)


def cbow_forward_batched(inputs_bc, embedding_table, w1, b1, w2, b2,
                         block_b=None):
    """inputs_bc: (B, C) int32 context indices, one CBOW example per row.
    embedding_table: (V, D); w1: (H, D); b1: (H,); w2: (V, H); b2: (V,).
    Returns (B, V) float32 log-probabilities."""
    B, _ = inputs_bc.shape
    V, D = embedding_table.shape
    H = w1.shape[0]

    if block_b is None:
        block_b = B if B <= 8 else 8
    assert B % block_b == 0, "batch must be a multiple of the batch tile"
    assert block_b == B or block_b % 8 == 0
    # NOTE: V is a multiple of 128 here (lane-dense output stores). If V ever
    # stops being a multiple of 128, pad the vocab dim and slice afterwards.

    idx = inputs_bc.astype(jnp.int32)
    b1_2d = b1.reshape(1, H)
    b2_2d = b2.reshape(1, V)

    grid_spec = pltpu.PrefetchScalarGridSpec(
        num_scalar_prefetch=1,
        grid=(B // block_b,),
        in_specs=[
            pl.BlockSpec((V, D), lambda i, idx_ref: (0, 0)),   # embedding table
            pl.BlockSpec((H, D), lambda i, idx_ref: (0, 0)),   # w1 (out, in)
            pl.BlockSpec((1, H), lambda i, idx_ref: (0, 0)),   # b1
            pl.BlockSpec((V, H), lambda i, idx_ref: (0, 0)),   # w2 (out, in)
            pl.BlockSpec((1, V), lambda i, idx_ref: (0, 0)),   # b2
        ],
        out_specs=pl.BlockSpec((block_b, V), lambda i, idx_ref: (i, 0)),
        scratch_shapes=[pltpu.VMEM((block_b, D), jnp.float32)],
    )

    return pl.pallas_call(
        cbow_kernel,
        out_shape=jax.ShapeDtypeStruct((B, V), jnp.float32),
        grid_spec=grid_spec,
        compiler_params=pltpu.CompilerParams(
            dimension_semantics=("parallel",)),
    )(idx, embedding_table, w1, b1_2d, w2, b2_2d)


def cbow_forward(inputs, embedding_table, w1, b1, w2, b2):
    """Module-faithful forward: inputs (C,) int32 -> (1, V) log-probs."""
    return cbow_forward_batched(inputs[None, :], embedding_table, w1, b1, w2, b2,
                                block_b=1)


def reference_forward_batched(inputs_bc, embedding_table, w1, b1, w2, b2):
    embeds = jnp.take(embedding_table, inputs_bc, axis=0).sum(axis=1)   # (B, D)
    h = jnp.maximum(embeds @ w1.T + b1, 0.0)
    logits = h @ w2.T + b2
    return jax.nn.log_softmax(logits, axis=-1)


if __name__ == "__main__":
    vocab_size = 256      # V (multiple of 128 -> lane-dense output)
    embedding_dim = 32    # D
    hidden = 128          # fixed by the module (nn.Linear(embedding_dim, 128))
    context_size = 8      # C (CBOW context window, e.g. 2*CONTEXT_SIZE)
    batch = 16            # B batched examples -> grid of 2 tiles of 8

    key = jax.random.PRNGKey(0)
    k_emb, k_w1, k_b1, k_w2, k_b2, k_in = jax.random.split(key, 6)

    # Deterministic synthetic parameters (shapes match nn.Embedding / nn.Linear).
    embedding_table = jax.random.normal(k_emb, (vocab_size, embedding_dim),
                                        dtype=jnp.float32)
    w1 = jax.random.normal(k_w1, (hidden, embedding_dim), jnp.float32) * 0.1
    b1 = jax.random.normal(k_b1, (hidden,), jnp.float32) * 0.1
    w2 = jax.random.normal(k_w2, (vocab_size, hidden), jnp.float32) * 0.1
    b2 = jax.random.normal(k_b2, (vocab_size,), jnp.float32) * 0.1

    inputs_batched = jax.random.randint(k_in, (batch, context_size), 0,
                                        vocab_size, dtype=jnp.int32)
    inputs_single = inputs_batched[0]

    # 1) Module-faithful single example: (C,) -> (1, V)
    out1 = jax.block_until_ready(
        cbow_forward(inputs_single, embedding_table, w1, b1, w2, b2))
    ref1 = reference_forward_batched(inputs_single[None, :], embedding_table,
                                     w1, b1, w2, b2)
    assert out1.shape == (1, vocab_size)
    assert jnp.allclose(out1, ref1, atol=1e-4, rtol=1e-4), "single mismatch"

    # 2) Batched inference path: (B, C) -> (B, V), grid over batch tiles
    out_b = jax.block_until_ready(
        cbow_forward_batched(inputs_batched, embedding_table, w1, b1, w2, b2,
                             block_b=8))
    ref_b = reference_forward_batched(inputs_batched, embedding_table,
                                      w1, b1, w2, b2)
    assert out_b.shape == (batch, vocab_size)
    assert jnp.allclose(out_b, ref_b, atol=1e-4, rtol=1e-4), "batched mismatch"

    print("KERNEL_OK")
</pallas_src>

<mosaic_0001>
module attributes {stable_mosaic.version = 11 : i64} {
  func.func @cbow_kernel(%arg0: i32, %arg1: memref<1x8xi32, #tpu.memory_space<smem>>, %arg2: memref<256x32xf32, #tpu.memory_space<vmem>>, %arg3: memref<128x32xf32, #tpu.memory_space<vmem>>, %arg4: memref<1x128xf32, #tpu.memory_space<vmem>>, %arg5: memref<256x128xf32, #tpu.memory_space<vmem>>, %arg6: memref<1x256xf32, #tpu.memory_space<vmem>>, %arg7: memref<1x256xf32, #tpu.memory_space<vmem>>, %arg8: memref<1x32xf32, #tpu.memory_space<vmem>>) attributes {dimension_semantics = [#tpu.dimension_semantics<parallel>], iteration_bounds = array<i64: 1>, scalar_prefetch = 1 : i64, scratch_operands = 1 : i64, tpu.core_type = #tpu.core_type<tc>, window_params = [{pipeline_mode = #tpu.pipeline_mode<synchronous>, transform_indices = @transform_0, window_bounds = array<i64: 256, 32>}, {pipeline_mode = #tpu.pipeline_mode<synchronous>, transform_indices = @transform_1, window_bounds = array<i64: 128, 32>}, {pipeline_mode = #tpu.pipeline_mode<synchronous>, transform_indices = @transform_2, window_bounds = array<i64: 1, 128>}, {pipeline_mode = #tpu.pipeline_mode<synchronous>, transform_indices = @transform_3, window_bounds = array<i64: 256, 128>}, {pipeline_mode = #tpu.pipeline_mode<synchronous>, transform_indices = @transform_4, window_bounds = array<i64: 1, 256>}, {transform_indices = @transform_5, window_bounds = array<i64: 1, 256>}]} {
    %c1_i32 = arith.constant 1 : i32
    %0 = arith.muli %arg0, %c1_i32 : i32
    %c0_i32 = arith.constant 0 : i32
    %1 = arith.addi %0, %c0_i32 : i32
    %2 = arith.index_cast %1 : i32 to index
    %c0 = arith.constant 0 : index
    %3 = memref.load %arg1[%2, %c0] : memref<1x8xi32, #tpu.memory_space<smem>>
    %4 = arith.index_cast %3 : i32 to index
    %c0_0 = arith.constant 0 : index
    %5 = vector.load %arg2[%4, %c0_0] : memref<256x32xf32, #tpu.memory_space<vmem>>, vector<1x32xf32>
    %c0_i32_1 = arith.constant 0 : i32
    %6 = arith.addi %0, %c0_i32_1 : i32
    %7 = arith.index_cast %6 : i32 to index
    %c1 = arith.constant 1 : index
    %8 = memref.load %arg1[%7, %c1] : memref<1x8xi32, #tpu.memory_space<smem>>
    %9 = arith.index_cast %8 : i32 to index
    %c0_2 = arith.constant 0 : index
    %10 = vector.load %arg2[%9, %c0_2] : memref<256x32xf32, #tpu.memory_space<vmem>>, vector<1x32xf32>
    %11 = arith.addf %5, %10 : vector<1x32xf32>
    %c0_i32_3 = arith.constant 0 : i32
    %12 = arith.addi %0, %c0_i32_3 : i32
    %13 = arith.index_cast %12 : i32 to index
    %c2 = arith.constant 2 : index
    %14 = memref.load %arg1[%13, %c2] : memref<1x8xi32, #tpu.memory_space<smem>>
    %15 = arith.index_cast %14 : i32 to index
    %c0_4 = arith.constant 0 : index
    %16 = vector.load %arg2[%15, %c0_4] : memref<256x32xf32, #tpu.memory_space<vmem>>, vector<1x32xf32>
    %17 = arith.addf %11, %16 : vector<1x32xf32>
    %c0_i32_5 = arith.constant 0 : i32
    %18 = arith.addi %0, %c0_i32_5 : i32
    %19 = arith.index_cast %18 : i32 to index
    %c3 = arith.constant 3 : index
    %20 = memref.load %arg1[%19, %c3] : memref<1x8xi32, #tpu.memory_space<smem>>
    %21 = arith.index_cast %20 : i32 to index
    %c0_6 = arith.constant 0 : index
    %22 = vector.load %arg2[%21, %c0_6] : memref<256x32xf32, #tpu.memory_space<vmem>>, vector<1x32xf32>
    %23 = arith.addf %17, %22 : vector<1x32xf32>
    %c0_i32_7 = arith.constant 0 : i32
    %24 = arith.addi %0, %c0_i32_7 : i32
    %25 = arith.index_cast %24 : i32 to index
    %c4 = arith.constant 4 : index
    %26 = memref.load %arg1[%25, %c4] : memref<1x8xi32, #tpu.memory_space<smem>>
    %27 = arith.index_cast %26 : i32 to index
    %c0_8 = arith.constant 0 : index
    %28 = vector.load %arg2[%27, %c0_8] : memref<256x32xf32, #tpu.memory_space<vmem>>, vector<1x32xf32>
    %29 = arith.addf %23, %28 : vector<1x32xf32>
    %c0_i32_9 = arith.constant 0 : i32
    %30 = arith.addi %0, %c0_i32_9 : i32
    %31 = arith.index_cast %30 : i32 to index
    %c5 = arith.constant 5 : index
    %32 = memref.load %arg1[%31, %c5] : memref<1x8xi32, #tpu.memory_space<smem>>
    %33 = arith.index_cast %32 : i32 to index
    %c0_10 = arith.constant 0 : index
    %34 = vector.load %arg2[%33, %c0_10] : memref<256x32xf32, #tpu.memory_space<vmem>>, vector<1x32xf32>
    %35 = arith.addf %29, %34 : vector<1x32xf32>
    %c0_i32_11 = arith.constant 0 : i32
    %36 = arith.addi %0, %c0_i32_11 : i32
    %37 = arith.index_cast %36 : i32 to index
    %c6 = arith.constant 6 : index
    %38 = memref.load %arg1[%37, %c6] : memref<1x8xi32, #tpu.memory_space<smem>>
    %39 = arith.index_cast %38 : i32 to index
    %c0_12 = arith.constant 0 : index
    %40 = vector.load %arg2[%39, %c0_12] : memref<256x32xf32, #tpu.memory_space<vmem>>, vector<1x32xf32>
    %41 = arith.addf %35, %40 : vector<1x32xf32>
    %c0_i32_13 = arith.constant 0 : i32
    %42 = arith.addi %0, %c0_i32_13 : i32
    %43 = arith.index_cast %42 : i32 to index
    %c7 = arith.constant 7 : index
    %44 = memref.load %arg1[%43, %c7] : memref<1x8xi32, #tpu.memory_space<smem>>
    %45 = arith.index_cast %44 : i32 to index
    %c0_14 = arith.constant 0 : index
    %46 = vector.load %arg2[%45, %c0_14] : memref<256x32xf32, #tpu.memory_space<vmem>>, vector<1x32xf32>
    %47 = arith.addf %41, %46 : vector<1x32xf32>
    %c0_15 = arith.constant 0 : index
    %c0_16 = arith.constant 0 : index
    %48 = vector.load %arg8[%c0_15, %c0_16] : memref<1x32xf32, #tpu.memory_space<vmem>>, vector<1x32xf32>
    tpu.vector_store %arg8[%c0_15, %c0_16], %47 {strides = array<i32>} : memref<1x32xf32, #tpu.memory_space<vmem>>, vector<1x32xf32>,
    %c0_17 = arith.constant 0 : index
    %c0_18 = arith.constant 0 : index
    %49 = vector.load %arg8[%c0_17, %c0_18] : memref<1x32xf32, #tpu.memory_space<vmem>>, vector<1x32xf32>
    %c0_19 = arith.constant 0 : index
    %c0_20 = arith.constant 0 : index
    %50 = vector.load %arg3[%c0_19, %c0_20] : memref<128x32xf32, #tpu.memory_space<vmem>>, vector<128x32xf32>
    %cst = arith.constant dense<0.000000e+00> : vector<1x128xf32>
    %51 = tpu.matmul %49, %50, %cst {dimension_numbers = #tpu.dot_dimension_numbers<[1], [1], [0], [0], [0, 0, 1, 0], [], []>} : vector<1x32xf32>, vector<128x32xf32>, vector<1x128xf32> -> vector<1x128xf32>
    %c0_21 = arith.constant 0 : index
    %c0_22 = arith.constant 0 : index
    %52 = vector.load %arg4[%c0_21, %c0_22] : memref<1x128xf32, #tpu.memory_space<vmem>>, vector<1x128xf32>
    %53 = arith.addf %51, %52 : vector<1x128xf32>
    %cst_23 = arith.constant 0.000000e+00 : f32
    %54 = vector.broadcast %cst_23 : f32 to vector<1x128xf32>
    %55 = arith.maximumf %53, %54 : vector<1x128xf32>
    %c0_24 = arith.constant 0 : index
    %c0_25 = arith.constant 0 : index
    %56 = vector.load %arg5[%c0_24, %c0_25] : memref<256x128xf32, #tpu.memory_space<vmem>>, vector<256x128xf32>
    %cst_26 = arith.constant dense<0.000000e+00> : vector<1x256xf32>
    %57 = tpu.matmul %55, %56, %cst_26 {dimension_numbers = #tpu.dot_dimension_numbers<[1], [1], [0], [0], [0, 0, 1, 0], [], []>} : vector<1x128xf32>, vector<256x128xf32>, vector<1x256xf32> -> vector<1x256xf32>
    %c0_27 = arith.constant 0 : index
    %c0_28 = arith.constant 0 : index
    %58 = vector.load %arg6[%c0_27, %c0_28] : memref<1x256xf32, #tpu.memory_space<vmem>>, vector<1x256xf32>
    %59 = arith.addf %57, %58 : vector<1x256xf32>
    %cst_29 = arith.constant dense<0xFF800000> : vector<1xf32>
    %60 = vector.multi_reduction <maximumf>, %59, %cst_29 [1] : vector<1x256xf32> to vector<1xf32>
    %61 = vector.shape_cast %60 : vector<1xf32> to vector<1x1xf32>
    %62 = vector.broadcast %61 : vector<1x1xf32> to vector<1x256xf32>
    %63 = arith.subf %59, %62 : vector<1x256xf32>
    %64 = math.exp %63 : vector<1x256xf32>
    %cst_30 = arith.constant dense<0.000000e+00> : vector<1xf32>
    %65 = vector.multi_reduction <add>, %64, %cst_30 [1] : vector<1x256xf32> to vector<1xf32>
    %66 = vector.shape_cast %65 : vector<1xf32> to vector<1x1xf32>
    %67 = math.log %66 : vector<1x1xf32>
    %68 = vector.broadcast %67 : vector<1x1xf32> to vector<1x256xf32>
    %69 = arith.subf %63, %68 : vector<1x256xf32>
    %c0_31 = arith.constant 0 : index
    %c0_32 = arith.constant 0 : index
    %70 = vector.load %arg7[%c0_31, %c0_32] : memref<1x256xf32, #tpu.memory_space<vmem>>, vector<1x256xf32>
    tpu.vector_store %arg7[%c0_31, %c0_32], %69 {strides = array<i32>} : memref<1x256xf32, #tpu.memory_space<vmem>>, vector<1x256xf32>,
    return
  }
  func.func @transform_0(%arg0: i32, %arg1: memref<1x8xi32, #tpu.memory_space<smem>>) -> (i32, i32) {
    %c0_i32 = arith.constant 0 : i32
    %c0_i32_0 = arith.constant 0 : i32
    %c0_i32_1 = arith.constant 0 : i32
    return %c0_i32, %c0_i32_0 : i32, i32
  }
  func.func @transform_1(%arg0: i32, %arg1: memref<1x8xi32, #tpu.memory_space<smem>>) -> (i32, i32) {
    %c0_i32 = arith.constant 0 : i32
    %c0_i32_0 = arith.constant 0 : i32
    %c0_i32_1 = arith.constant 0 : i32
    return %c0_i32, %c0_i32_0 : i32, i32
  }
  func.func @transform_2(%arg0: i32, %arg1: memref<1x8xi32, #tpu.memory_space<smem>>) -> (i32, i32) {
    %c0_i32 = arith.constant 0 : i32
    %c0_i32_0 = arith.constant 0 : i32
    %c0_i32_1 = arith.constant 0 : i32
    return %c0_i32, %c0_i32_0 : i32, i32
  }
  func.func @transform_3(%arg0: i32, %arg1: memref<1x8xi32, #tpu.memory_space<smem>>) -> (i32, i32) {
    %c0_i32 = arith.constant 0 : i32
    %c0_i32_0 = arith.constant 0 : i32
    %c0_i32_1 = arith.constant 0 : i32
    return %c0_i32, %c0_i32_0 : i32, i32
  }
  func.func @transform_4(%arg0: i32, %arg1: memref<1x8xi32, #tpu.memory_space<smem>>) -> (i32, i32) {
    %c0_i32 = arith.constant 0 : i32
    %c0_i32_0 = arith.constant 0 : i32
    %c0_i32_1 = arith.constant 0 : i32
    return %c0_i32, %c0_i32_0 : i32, i32
  }
  func.func @transform_5(%arg0: i32, %arg1: memref<1x8xi32, #tpu.memory_space<smem>>) -> (i32, i32) {
    %c0_i32 = arith.constant 0 : i32
    %c0_i32_0 = arith.constant 0 : i32
    return %arg0, %c0_i32 : i32, i32
  }
}

</mosaic_0001>

<llo_original>
// kernel: tpu_custom_call.1
$region0: #{tpu_custom_call.1}
  #allocation0 [shape = 'u32[]', space=smem, size = 0x4, offset = 0x4, fixed_abs, tag = 'smem constant byte address 0x4 - core index']
  #allocation1 [shape = 'u32[144,128]{1,0:T(1,128)}', space=vmem, size = 0x12000, scoped, tag = 'internal scratch']
  #allocation2 [shape = 'f32[1,32]{1,0:T(1,128)}', space=vmem, size = 0x200, scoped, tag = 'scratch operand']
  #allocation3 [shape = 's32[1]{0}', space=sflag, size = 0x4, scoped, tag = 'scoped memory for tpu_custom_call.1']
  #allocation4 [shape = 'u8[512]{0}', space=smem, size = 0x200, scoped, tag = 'prefetched SMEM operand 0']
  %s0 = inlined_call_operand.vmem [shape: s32[1,8], index: 0, kind: input, shape index: {}]
  %s1 = inlined_call_operand.vmem [shape: f32[256,32], index: 1, kind: input, shape index: {}]
  %s2 = inlined_call_operand.vmem [shape: f32[128,32], index: 2, kind: input, shape index: {}]
  %s3 = inlined_call_operand.vmem [shape: f32[1,128], index: 3, kind: input, shape index: {}]
  %s4 = inlined_call_operand.vmem [shape: f32[256,128], index: 4, kind: input, shape index: {}]
  %s5 = inlined_call_operand.vmem [shape: f32[1,256], index: 5, kind: input, shape index: {}]
  %s6 = inlined_call_operand.hbm [shape: f32[1,256], index: 6, kind: output, shape index: {}]
  %s7 = sld [smem:[#allocation0]]
  $region30: #{tpu_custom_call.1} parent=0
    _
  %s9 = ssub.s32 1, %s7
  %s10 = scalar_select 0, %s9, %s7
  %s11 = sshll.u32 %s0, 4
  %s12 = int_to_ptr.vmem [resolvable:$true] %s11
  %14 = dma.vmem_to_smem %s12, 16, [#allocation4], [#allocation3]
  %15 = dma.done [#allocation3], 16
  %16 = sfence
  $region1: #{tpu_custom_call.1} parent=0
    #allocation5 [shape = 'u8[1024]{0}', space=vmem, size = 0x400, scoped, tag = 'output window, operand 0, single buffered']
    #allocation6 [shape = 's32[1]{0}', space=sflag, size = 0x4, scoped, tag = 'scoped memory for tpu_custom_call.1']
    %17 = vsyncpa [#allocation6], 0
    // Predicated region
    $region2: #{tpu_custom_call.1} parent=1 // pred_check
      _
    $region3: #{tpu_custom_call.1} parent=1 // pred_check_branch
      %19 = sbr.rel (0) target = $region5
    $region4: #{tpu_custom_call.1} parent=1 // pred_region
      _
    $region5: #{tpu_custom_call.1} parent=1 // pred_fallthru
      _
    // Predicated region
    $region6: #{tpu_custom_call.1} parent=1 // pred_check
      _
    $region7: #{tpu_custom_call.1} parent=1 // pred_check_branch
      %21 = sbr.rel (0) target = $region9
    $region8: #{tpu_custom_call.1} parent=1 // pred_region
      _
    $region9: #{tpu_custom_call.1} parent=1 // pred_fallthru
      _
    // Predicated region
    $region10: #{tpu_custom_call.1} parent=1 // pred_check
      _
    $region11: #{tpu_custom_call.1} parent=1 // pred_check_branch
      %23 = sbr.rel (0) target = $region13
    $region12: #{tpu_custom_call.1} parent=1 // pred_region
      _
    $region13: #{tpu_custom_call.1} parent=1 // pred_fallthru
      _
    // Predicated region
    $region14: #{tpu_custom_call.1} parent=1 // pred_check
      _
    $region15: #{tpu_custom_call.1} parent=1 // pred_check_branch
      %25 = sbr.rel (0) target = $region17
    $region16: #{tpu_custom_call.1} parent=1 // pred_region
      _
    $region17: #{tpu_custom_call.1} parent=1 // pred_fallthru
      _
    // Predicated region
    $region18: #{tpu_custom_call.1} parent=1 // pred_check
      _
    $region19: #{tpu_custom_call.1} parent=1 // pred_check_branch
      %27 = sbr.rel (0) target = $region21
    $region20: #{tpu_custom_call.1} parent=1 // pred_region
      _
    $region21: #{tpu_custom_call.1} parent=1 // pred_fallthru
      _
    %s28 = smul.u32 0, 128
    %s29 = sld [smem:[#allocation4 + %s28]]
    %s30 = scalar_lea.vmem %s1, %s29
    %v31 = vld [vmem:[%s30] sm:$0x1]
    %s32 = sadd.s32 %s28, 1
    %s33 = sld [smem:[#allocation4 + %s32]]
    %s34 = scalar_lea.vmem %s1, %s33
    %v35 = vld [vmem:[%s34] sm:$0x1]
    %v36 = vadd.f32 %v31, %v35
    %s37 = sadd.s32 %s28, 2
    %s38 = sld [smem:[#allocation4 + %s37]]
    %s39 = scalar_lea.vmem %s1, %s38
    %v40 = vld [vmem:[%s39] sm:$0x1]
    %v41 = vadd.f32 %v36, %v40
    %s42 = sadd.s32 %s28, 3
    %s43 = sld [smem:[#allocation4 + %s42]]
    %s44 = scalar_lea.vmem %s1, %s43
    %v45 = vld [vmem:[%s44] sm:$0x1]
    %v46 = vadd.f32 %v41, %v45
    %s47 = sadd.s32 %s28, 4
    %s48 = sld [smem:[#allocation4 + %s47]]
    %s49 = scalar_lea.vmem %s1, %s48
    %v50 = vld [vmem:[%s49] sm:$0x1]
    %v51 = vadd.f32 %v46, %v50
    %s52 = sadd.s32 %s28, 5
    %s53 = sld [smem:[#allocation4 + %s52]]
    %s54 = scalar_lea.vmem %s1, %s53
    %v55 = vld [vmem:[%s54] sm:$0x1]
    %v56 = vadd.f32 %v51, %v55
    %s57 = sadd.s32 %s28, 6
    %s58 = sld [smem:[#allocation4 + %s57]]
    %s59 = scalar_lea.vmem %s1, %s58
    %v60 = vld [vmem:[%s59] sm:$0x1]
    %v61 = vadd.f32 %v56, %v60
    %s62 = sadd.s32 %s28, 7
    %s63 = sld [smem:[#allocation4 + %s62]]
    %s64 = scalar_lea.vmem %s1, %s63
    %v65 = vld [vmem:[%s64] sm:$0x1]
    %v66 = vadd.f32 %v61, %v65
    %vm67 = vcmask 253952
    %68 = vst.msk [vmem:[#allocation2] sm:$0x1] %vm67, %v66
    %v69 = vld [vmem:[#allocation2] sm:$0x1]
    %v70 = vld [vmem:[%s2] sm:$0xff]
    %v71 = vld [vmem:[%s2 + $0x8] sm:$0xff]
    %v72 = vld [vmem:[%s2 + $0x10] sm:$0xff]
    %v73 = vld [vmem:[%s2 + $0x18] sm:$0xff]
    %v74 = vld [vmem:[%s2 + $0x20] sm:$0xff]
    %v75 = vld [vmem:[%s2 + $0x28] sm:$0xff]
    %v76 = vld [vmem:[%s2 + $0x30] sm:$0xff]
    %v77 = vld [vmem:[%s2 + $0x38] sm:$0xff]
    %v78 = vld [vmem:[%s2 + $0x40] sm:$0xff]
    %v79 = vld [vmem:[%s2 + $0x48] sm:$0xff]
    %v80 = vld [vmem:[%s2 + $0x50] sm:$0xff]
    %v81 = vld [vmem:[%s2 + $0x58] sm:$0xff]
    %v82 = vld [vmem:[%s2 + $0x60] sm:$0xff]
    %v83 = vld [vmem:[%s2 + $0x68] sm:$0xff]
    %v84 = vld [vmem:[%s2 + $0x70] sm:$0xff]
    %v85 = vld [vmem:[%s2 + $0x78] sm:$0xff]
    %v86 = vld [vmem:[%s3] sm:$0x1]
    %vm87 = vcmask 261120
    %v89 = vsel %vm87, %v69, 0
    %v92 = vsel %vm87, %v70, 0
    %v95 = vsel %vm87, %v71, 0
    %v98 = vsel %vm87, %v72, 0
    %v101 = vsel %vm87, %v73, 0
    %v104 = vsel %vm87, %v74, 0
    %v107 = vsel %vm87, %v75, 0
    %v110 = vsel %vm87, %v76, 0
    %v113 = vsel %vm87, %v77, 0
    %v116 = vsel %vm87, %v78, 0
    %v119 = vsel %vm87, %v79, 0
    %v122 = vsel %vm87, %v80, 0
    %v125 = vsel %vm87, %v81, 0
    %v128 = vsel %vm87, %v82, 0
    %v131 = vsel %vm87, %v83, 0
    %v134 = vsel %vm87, %v84, 0
    %v137 = vsel %vm87, %v85, 0
    %139 = vmatprep.subr.mxu0 0.0
    %140 = vmatpush1.xpose.msra.mxu0 %v92
    %141 = vmatprep.subr.mxu0 0.0
    %142 = vmatpush1.xpose.msra.mxu0 %v95
    %143 = vmatprep.subr.mxu0 0.0
    %144 = vmatpush1.xpose.msra.mxu0 %v98
    %145 = vmatprep.subr.mxu0 0.0
    %146 = vmatpush1.xpose.msra.mxu0 %v101
    %147 = vmatprep.subr.mxu0 0.0
    %148 = vmatpush1.xpose.msra.mxu0 %v104
    %149 = vmatprep.subr.mxu0 0.0
    %150 = vmatpush1.xpose.msra.mxu0 %v107
    %151 = vmatprep.subr.mxu0 0.0
    %152 = vmatpush1.xpose.msra.mxu0 %v110
    %153 = vmatprep.subr.mxu0 0.0
    %154 = vmatpush1.xpose.msra.mxu0 %v113
    %155 = vmatprep.subr.mxu0 0.0
    %156 = vmatpush1.xpose.msra.mxu0 %v116
    %157 = vmatprep.subr.mxu0 0.0
    %158 = vmatpush1.xpose.msra.mxu0 %v119
    %159 = vmatprep.subr.mxu0 0.0
    %160 = vmatpush1.xpose.msra.mxu0 %v122
    %161 = vmatprep.subr.mxu0 0.0
    %162 = vmatpush1.xpose.msra.mxu0 %v125
    %163 = vmatprep.subr.mxu0 0.0
    %164 = vmatpush1.xpose.msra.mxu0 %v128
    %165 = vmatprep.subr.mxu0 0.0
    %166 = vmatpush1.xpose.msra.mxu0 %v131
    %167 = vmatprep.subr.mxu0 0.0
    %168 = vmatpush1.xpose.msra.mxu0 %v134
    %169 = vmatprep.subr.mxu0 0.0
    %170 = vmatpush1.xpose.msra.mxu0 %v137
    %171 = vmatprep.subr.mxu0 0.0
    %172 = vmatpush1.xpose.msra.mxu0 0.0
    %173 = vmatprep.subr.mxu0 0.0
    %174 = vmatpush1.xpose.msra.mxu0 0.0
    %175 = vmatprep.subr.mxu0 0.0
    %176 = vmatpush1.xpose.msra.mxu0 0.0
    %177 = vmatprep.subr.mxu0 0.0
    %178 = vmatpush1.xpose.msra.mxu0 0.0
    %179 = vmatprep.subr.mxu0 0.0
    %180 = vmatpush1.xpose.msra.mxu0 0.0
    %181 = vmatprep.subr.mxu0 0.0
    %182 = vmatpush1.xpose.msra.mxu0 0.0
    %183 = vmatprep.subr.mxu0 0.0
    %184 = vmatpush1.xpose.msra.mxu0 0.0
    %185 = vmatprep.subr.mxu0 0.0
    %186 = vmatpush1.xpose.msra.mxu0 0.0
    %187 = vmatprep.subr.mxu0 0.0
    %188 = vmatpush1.xpose.msra.mxu0 0.0
    %189 = vmatprep.subr.mxu0 0.0
    %190 = vmatpush1.xpose.msra.mxu0 0.0
    %191 = vmatprep.subr.mxu0 0.0
    %192 = vmatpush1.xpose.msra.mxu0 0.0
    %193 = vmatprep.subr.mxu0 0.0
    %194 = vmatpush1.xpose.msra.mxu0 0.0
    %195 = vmatprep.subr.mxu0 0.0
    %196 = vmatpush1.xpose.msra.mxu0 0.0
    %197 = vmatprep.subr.mxu0 0.0
    %198 = vmatpush1.xpose.msra.mxu0 0.0
    %199 = vmatprep.subr.mxu0 0.0
    %200 = vmatpush1.xpose.msra.mxu0 0.0
    %201 = vmatprep.subr.mxu0 0.0
    %202 = vmatpush1.xpose.msra.mxu0 0.0
    %203 = vmatprep.mubr.f32.mxu0 0.0
    %204 = vmatmul.mubr.f32.gmra.mrb[0].mxu0 %v89
    %v205 = vpop.f32.mrb[0].mxu0
    %v206 = vadd.f32 %v86, %v205
    %v207 = vpop.f32.mrb[0].mxu0
    %208 = vdwg.mxu0
    %v209 = vmax.f32 %v206, 0.0
    %v210 = vld [vmem:[%s4] sm:$0xff]
    %v211 = vld [vmem:[%s4 + $0x8] sm:$0xff]
    %v212 = vld [vmem:[%s4 + $0x10] sm:$0xff]
    %v213 = vld [vmem:[%s4 + $0x18] sm:$0xff]
    %v214 = vld [vmem:[%s4 + $0x20] sm:$0xff]
    %v215 = vld [vmem:[%s4 + $0x28] sm:$0xff]
    %v216 = vld [vmem:[%s4 + $0x30] sm:$0xff]
    %v217 = vld [vmem:[%s4 + $0x38] sm:$0xff]
    %v218 = vld [vmem:[%s4 + $0x40] sm:$0xff]
    %v219 = vld [vmem:[%s4 + $0x48] sm:$0xff]
    %v220 = vld [vmem:[%s4 + $0x50] sm:$0xff]
    %v221 = vld [vmem:[%s4 + $0x58] sm:$0xff]
    %v222 = vld [vmem:[%s4 + $0x60] sm:$0xff]
    %v223 = vld [vmem:[%s4 + $0x68] sm:$0xff]
    %v224 = vld [vmem:[%s4 + $0x70] sm:$0xff]
    %v225 = vld [vmem:[%s4 + $0x78] sm:$0xff]
    %v226 = vld [vmem:[%s4 + $0x80] sm:$0xff]
    %v227 = vld [vmem:[%s4 + $0x88] sm:$0xff]
    %v228 = vld [vmem:[%s4 + $0x90] sm:$0xff]
    %v229 = vld [vmem:[%s4 + $0x98] sm:$0xff]
    %v230 = vld [vmem:[%s4 + $0xa0] sm:$0xff]
    %v231 = vld [vmem:[%s4 + $0xa8] sm:$0xff]
    %v232 = vld [vmem:[%s4 + $0xb0] sm:$0xff]
    %v233 = vld [vmem:[%s4 + $0xb8] sm:$0xff]
    %v234 = vld [vmem:[%s4 + $0xc0] sm:$0xff]
    %v235 = vld [vmem:[%s4 + $0xc8] sm:$0xff]
    %v236 = vld [vmem:[%s4 + $0xd0] sm:$0xff]
    %v237 = vld [vmem:[%s4 + $0xd8] sm:$0xff]
    %v238 = vld [vmem:[%s4 + $0xe0] sm:$0xff]
    %v239 = vld [vmem:[%s4 + $0xe8] sm:$0xff]
    %v240 = vld [vmem:[%s4 + $0xf0] sm:$0xff]
    %v241 = vld [vmem:[%s4 + $0xf8] sm:$0xff]
    %v242 = vld [vmem:[%s5] sm:$0x3]
    %v244 = vlaneseq
    %v245 = vshrl.u32 %v244, 7
    %v246 = vsub.s32 0, %v245
    %v247 = vrot.slane %v242, %v246
    %v248 = vlaneseq
    %v249 = vshrl.u32 %v248, 7
    %v250 = vsub.s32 1, %v249
    %v251 = vrot.slane %v242, %v250
    %254 = vmatprep.subr.mxu0 0.0
    %255 = vmatpush1.xpose.msra.mxu0 %v210
    %256 = vmatprep.subr.mxu0 0.0
    %257 = vmatpush1.xpose.msra.mxu0 %v211
    %258 = vmatprep.subr.mxu0 0.0
    %259 = vmatpush1.xpose.msra.mxu0 %v212
    %260 = vmatprep.subr.mxu0 0.0
    %261 = vmatpush1.xpose.msra.mxu0 %v213
    %262 = vmatprep.subr.mxu0 0.0
    %263 = vmatpush1.xpose.msra.mxu0 %v214
    %264 = vmatprep.subr.mxu0 0.0
    %265 = vmatpush1.xpose.msra.mxu0 %v215
    %266 = vmatprep.subr.mxu0 0.0
    %267 = vmatpush1.xpose.msra.mxu0 %v216
    %268 = vmatprep.subr.mxu0 0.0
    %269 = vmatpush1.xpose.msra.mxu0 %v217
    %270 = vmatprep.subr.mxu0 0.0
    %271 = vmatpush1.xpose.msra.mxu0 %v218
    %272 = vmatprep.subr.mxu0 0.0
    %273 = vmatpush1.xpose.msra.mxu0 %v219
    %274 = vmatprep.subr.mxu0 0.0
    %275 = vmatpush1.xpose.msra.mxu0 %v220
    %276 = vmatprep.subr.mxu0 0.0
    %277 = vmatpush1.xpose.msra.mxu0 %v221
    %278 = vmatprep.subr.mxu0 0.0
    %279 = vmatpush1.xpose.msra.mxu0 %v222
    %280 = vmatprep.subr.mxu0 0.0
    %281 = vmatpush1.xpose.msra.mxu0 %v223
    %282 = vmatprep.subr.mxu0 0.0
    %283 = vmatpush1.xpose.msra.mxu0 %v224
    %284 = vmatprep.subr.mxu0 0.0
    %285 = vmatpush1.xpose.msra.mxu0 %v225
    %286 = vmatprep.subr.mxu0 0.0
    %287 = vmatpush1.xpose.msra.mxu0 %v226
    %288 = vmatprep.subr.mxu0 0.0
    %289 = vmatpush1.xpose.msra.mxu0 %v227
    %290 = vmatprep.subr.mxu0 0.0
    %291 = vmatpush1.xpose.msra.mxu0 %v228
    %292 = vmatprep.subr.mxu0 0.0
    %293 = vmatpush1.xpose.msra.mxu0 %v229
    %294 = vmatprep.subr.mxu0 0.0
    %295 = vmatpush1.xpose.msra.mxu0 %v230
    %296 = vmatprep.subr.mxu0 0.0
    %297 = vmatpush1.xpose.msra.mxu0 %v231
    %298 = vmatprep.subr.mxu0 0.0
    %299 = vmatpush1.xpose.msra.mxu0 %v232
    %300 = vmatprep.subr.mxu0 0.0
    %301 = vmatpush1.xpose.msra.mxu0 %v233
    %302 = vmatprep.subr.mxu0 0.0
    %303 = vmatpush1.xpose.msra.mxu0 %v234
    %304 = vmatprep.subr.mxu0 0.0
    %305 = vmatpush1.xpose.msra.mxu0 %v235
    %306 = vmatprep.subr.mxu0 0.0
    %307 = vmatpush1.xpose.msra.mxu0 %v236
    %308 = vmatprep.subr.mxu0 0.0
    %309 = vmatpush1.xpose.msra.mxu0 %v237
    %310 = vmatprep.subr.mxu0 0.0
    %311 = vmatpush1.xpose.msra.mxu0 %v238
    %312 = vmatprep.subr.mxu0 0.0
    %313 = vmatpush1.xpose.msra.mxu0 %v239
    %314 = vmatprep.subr.mxu0 0.0
    %315 = vmatpush1.xpose.msra.mxu0 %v240
    %316 = vmatprep.subr.mxu0 0.0
    %317 = vmatpush1.xpose.msra.mxu0 %v241
    %318 = vmatprep.mubr.f32.mxu0 0.0
    %319 = vmatmul.mubr.f32.gmra.mrb[0].mxu0 %v209
    %v320 = vpop.f32.mrb[0].mxu0
    %v321 = vadd.f32 %v247, %v320
    %v322 = vpop.f32.mrb[0].mxu0
    %v323 = vadd.f32 %v251, %v322
    %324 = vdwg.mxu0
    %vm325 = vcmask 1040384
    %v326 = vsel %vm325, %v321, -inf
    %v327 = vsel %vm325, %v323, -inf
    %v328 = vmax.f32 %v326, %v327
    %329 = vmax.xlane.f32.xlu0 %v328
    %v330 = vpop.xlane.xlu0 %329
    %v331 = vsub.f32 %v321, %v330
    %v332 = vsub.f32 %v323, %v330
    %v333 = vmul.f32 %v331, 1.442695
    %v334 = vpow.pop %v333
    %v335 = vmul.f32 %v332, 1.442695
    %v336 = vpow.pop %v335
    %v337 = vsel %vm325, %v334, 0.0
    %v338 = vsel %vm325, %v336, 0.0
    %v339 = vadd.f32 %v337, %v338
    %340 = vadd.xlane.f32.xlu0 %v339
    %v341 = vpop.xlane.xlu0 %340
    %v342 = vlog2.pop %v341
    %v343 = vmul.f32 %v342, 0.6931472
    %v344 = vsub.f32 %v331, %v343
    %v345 = vsub.f32 %v332, %v343
    %v348 = vcombine.low %v344, %v345
    %v350 = vunpack.c.l.s4 1966171168
    %v351 = vunpack.c.0.s8 %v350
    %v352 = vlaneseq
    %v353 = vshrl.u32 %v352, 7
    %v354 = vsub.s32 %v351, %v353
    %v355 = vrot.slane %v348, %v354
    %v357 = vunpack.c.l.s4 1966171168
    %v358 = vunpack.c.0.s8 %v357
    %v359 = vlaneseq
    %v360 = vshrl.u32 %v359, 7
    %v361 = vsub.s32 %v358, %v360
    %v362 = vrot.slane %v355, %v361
    %v364 = vlaneseq
    %vm365 = vcmp.ge.s32.totalorder %v364, 0
    %vm366 = vcmp.lt.s32.totalorder %v364, 256
    %vm367 = vmand %vm365, %vm366
    %368 = vst.msk [vmem:[#allocation5] sm:$0x3] %vm367, %v362
    // Predicated region
    $region22: #{tpu_custom_call.1} parent=1 // pred_check
      _
    $region23: #{tpu_custom_call.1} parent=1 // pred_check_branch
      %370 = sbr.rel (0) target = $region25
    $region24: #{tpu_custom_call.1} parent=1 // pred_region
      %s372 = ssub.s32 32, 32
      %373 = vsyncadd [#allocation6], %s372
      %s375 = sshll.u32 [#allocation5], 4
      %s376 = int_to_ptr.vmem [resolvable:$true] %s375
      %378 = dma.vmem_to_hbm [thread:$0]  %s376, 32, %s6, [#allocation6]
    $region25: #{tpu_custom_call.1} parent=1 // pred_fallthru
      _
    // Predicated region
    $region26: #{tpu_custom_call.1} parent=1 // pred_check
      _
    $region27: #{tpu_custom_call.1} parent=1 // pred_check_branch
      %380 = sbr.rel (0) target = $region29
    $region28: #{tpu_custom_call.1} parent=1 // pred_region
      %381 = dma.done [#allocation6], 32
    $region29: #{tpu_custom_call.1} parent=1 // pred_fallthru
      _
    %382 = vsyncpa [#allocation6], 1

</llo_original>
